<compile_context>
chip_gen: v5e
topology: v5e:2x2
jax: 0.10.0
libtpu: 0.0.40
codegen_flags: <defaults>
</compile_context>

<pallas_src>
import jax
import jax.numpy as jnp
from jax.experimental import pallas as pl
from jax.experimental.pallas import tpu as pltpu


def _round_up(x, m):
    return (x + m - 1) // m * m


# ---------------------------------------------------------------------------
# Kernel
# ---------------------------------------------------------------------------
def _make_kernel(in_rows, w2_rows, offsets):
    r_w1, r_b1, r_w2, r_b2, r_w3, r_b3 = offsets

    def kernel(x_ref, p_ref, o_ref):
        x = x_ref[...]                                    # (Bt, in_rows), K padded to 128-lane

        # Static, full-lane-width slices of the packed parameter block
        # (zero runtime cost; no masked layouts).
        w1 = p_ref[r_w1:r_w1 + in_rows, :]                # fused encoder+layer1 weight
        b1 = p_ref[r_b1:r_b1 + 1, :]                      # fused bias (1, 128)
        w2 = p_ref[r_w2:r_w2 + w2_rows, :]                # (128, 128)
        b2 = p_ref[r_b2:r_b2 + 1, :]                      # (1, 128)
        w3r = p_ref[r_w3:r_w3 + 1, :]                     # head weight as row (1, 128)
        b3 = p_ref[r_b3:r_b3 + 1, 0:1]                    # head bias (1, 1)

        # Fused (encoder @ layer1) -> ReLU -> layer2 -> ReLU, lane-padded to 128.
        # Padded lanes are exactly 0 (zero weight columns + zero bias), so they
        # stay 0 through ReLU and contribute nothing downstream.
        h = jnp.dot(x, w1, preferred_element_type=jnp.float32) + b1
        h = jnp.maximum(h, 0.0)
        h = jnp.dot(h, w2, preferred_element_type=jnp.float32) + b2
        h = jnp.maximum(h, 0.0)

        # Value head: contract the hidden axis of both operands so the result is
        # emitted lane-dense as (1, Bt) — avoids an N=1 masked-column matmul and
        # a masked (Bt, 1) partial store.
        v = jax.lax.dot_general(
            w3r, h, (((1,), (1,)), ((), ())),
            preferred_element_type=jnp.float32) + b3      # (1, Bt)

        o_ref[...] = v.astype(o_ref.dtype)

    return kernel


# ---------------------------------------------------------------------------
# Parameter fusion + packing (done once, outside the kernel call)
# ---------------------------------------------------------------------------
def pack_params(params):
    """Fuse encoder into layer1 and pack everything into one (rows, 128) f32 buffer."""
    (we, be), (w1, b1), (w2, b2), (w3, b3) = params
    we, be, w1, b1 = map(jnp.asarray, (we, be, w1, b1))
    w2, b2, w3, b3 = map(jnp.asarray, (w2, b2, w3, b3))

    in_dim = we.shape[0]
    h1 = w1.shape[1]
    h2 = w2.shape[1]
    assert w3.shape == (h2, 1) and b3.shape == (1, 1)

    # Algebraic fusion: no nonlinearity between encoder and first MLP linear.
    w1f = (we @ w1).astype(jnp.float32)                   # (in_dim, h1)
    b1f = (be @ w1 + b1).astype(jnp.float32)              # (1, h1)

    lanes = max(128, _round_up(max(h1, h2), 128))         # full-lane hidden width
    in_rows = _round_up(in_dim, 128)                      # input K padded to 128
    w2_rows = lanes                                       # hidden carried at full lane width

    # Row layout inside the packed block (sections on 8-sublane boundaries).
    r_w1 = 0
    r_b1 = r_w1 + in_rows
    r_w2 = r_b1 + 8
    r_b2 = r_w2 + w2_rows
    r_w3 = r_b2 + 8
    r_b3 = r_w3 + 8
    n_rows = r_b3 + 8

    buf = jnp.zeros((n_rows, lanes), jnp.float32)
    buf = buf.at[r_w1:r_w1 + in_dim, 0:h1].set(w1f)
    buf = buf.at[r_b1:r_b1 + 1, 0:h1].set(b1f)
    buf = buf.at[r_w2:r_w2 + h1, 0:h2].set(w2.astype(jnp.float32))
    buf = buf.at[r_b2:r_b2 + 1, 0:h2].set(b2.astype(jnp.float32))
    buf = buf.at[r_w3:r_w3 + 1, 0:h2].set(w3.T.astype(jnp.float32))
    buf = buf.at[r_b3:r_b3 + 1, 0:1].set(b3.astype(jnp.float32))

    cfg = dict(in_dim=in_dim, in_rows=in_rows, w2_rows=w2_rows,
               offsets=(r_w1, r_b1, r_w2, r_b2, r_w3, r_b3))
    return buf, cfg


# ---------------------------------------------------------------------------
# Forward wrapper
# ---------------------------------------------------------------------------
def critic_adv_forward(state_nchw, packed):
    """state_nchw: [B, C, H, W] float32. Returns value [B, 1] float32."""
    p_buf, cfg = packed
    in_dim, in_rows, w2_rows = cfg["in_dim"], cfg["in_rows"], cfg["w2_rows"]

    B = state_nchw.shape[0]
    x = state_nchw.reshape(B, -1).astype(jnp.float32)     # glue: flatten NCHW
    assert x.shape[1] == in_dim

    # Pad feature dim to a full 128-lane K (unmasked loads, full MXU pass).
    if in_rows != in_dim:
        x = jnp.pad(x, ((0, 0), (0, in_rows - in_dim)))

    # Batch tiling: pad batch to >=128.  Tiles are large (per-grid-step overhead
    # dominates at small tiles) but for batches needing more than one tile we
    # keep n_tiles >= 2 so the "parallel" axis can shard across v7x's two TCs.
    b_pad = _round_up(max(B, 128), 128)
    if b_pad <= 128:
        bt = b_pad                                        # single full-lane tile
    else:
        bt = min(1024, _round_up(pl.cdiv(b_pad, 2), 128))
        b_pad = _round_up(b_pad, bt)
    n_tiles = b_pad // bt

    if b_pad != B:
        x = jnp.pad(x, ((0, b_pad - B), (0, 0)))

    kernel = _make_kernel(in_rows, w2_rows, cfg["offsets"])

    out = pl.pallas_call(
        kernel,
        out_shape=jax.ShapeDtypeStruct((1, b_pad), jnp.float32),
        grid=(n_tiles,),
        in_specs=[
            # Activations: tiled over the batch, pipelined against compute.
            pl.BlockSpec((bt, in_rows), lambda i: (i, 0)),
            # Packed weights: constant block index -> stays VMEM-resident.
            pl.BlockSpec(p_buf.shape, lambda i: (0, 0)),
        ],
        # Lane-dense output: each tile writes a (1, bt) chunk of a (1, b_pad) row.
        out_specs=pl.BlockSpec((1, bt), lambda i: (0, i)),
        compiler_params=pltpu.CompilerParams(
            dimension_semantics=("parallel",)),
    )(x, p_buf)

    return out[0, :B].reshape(B, 1)


# ---------------------------------------------------------------------------
# Init helpers (mimic torch.nn.Linear default init)
# ---------------------------------------------------------------------------
def _linear_init(key, fan_in, fan_out):
    kw, kb = jax.random.split(key)
    bound = 1.0 / jnp.sqrt(jnp.float32(fan_in))
    w = jax.random.uniform(kw, (fan_in, fan_out), jnp.float32, -bound, bound)
    b = jax.random.uniform(kb, (1, fan_out), jnp.float32, -bound, bound)
    return w, b


def make_params(key, in_dim, feature_dim, critic_net_dims):
    keys = jax.random.split(key, 2 + len(critic_net_dims))
    params = [_linear_init(keys[0], in_dim, feature_dim)]   # encoder stand-in
    prev = feature_dim
    for i, d in enumerate(critic_net_dims):
        params.append(_linear_init(keys[1 + i], prev, d))
        prev = d
    params.append(_linear_init(keys[-1], prev, 1))          # value head
    return tuple(params)


def _reference(state_nchw, params):
    x = state_nchw.reshape(state_nchw.shape[0], -1).astype(jnp.float32)
    (we, be), (w1, b1), (w2, b2), (w3, b3) = params
    r = x @ we + be
    r = jnp.maximum(r @ w1 + b1, 0.0)
    r = jnp.maximum(r @ w2 + b2, 0.0)
    return r @ w3 + b3


if __name__ == "__main__":
    key = jax.random.PRNGKey(0)
    k_state, k_state2, k_params = jax.random.split(key, 3)

    # Small shapes: state NCHW [B, 4, 4, 4] -> in_dim=64, hidden=32.
    C, H, W = 4, 4, 4
    feature_dim = 32
    critic_net_dims = [32, 32]

    params = make_params(k_params, C * H * W, feature_dim, critic_net_dims)
    packed = pack_params(params)

    # Case 1: small batch (single 128-row tile path).
    B1 = 8
    state1 = jax.random.normal(k_state, (B1, C, H, W), jnp.float32)
    v1 = jax.block_until_ready(critic_adv_forward(state1, packed))
    assert v1.shape == (B1, 1)
    assert jnp.allclose(v1, _reference(state1, params), atol=1e-4, rtol=1e-4)

    # Case 2: batch needing padding + 2 parallel tiles (v7x-style path).
    B2 = 300
    state2 = jax.random.normal(k_state2, (B2, C, H, W), jnp.float32)
    v2 = jax.block_until_ready(critic_adv_forward(state2, packed))
    assert v2.shape == (B2, 1)
    assert jnp.allclose(v2, _reference(state2, params), atol=1e-4, rtol=1e-4)

    print("KERNEL_OK")
</pallas_src>

<mosaic_0001>
module attributes {stable_mosaic.version = 11 : i64} {
  func.func @kernel(%arg0: i32, %arg1: memref<128x128xf32, #tpu.memory_space<vmem>>, %arg2: memref<288x128xf32, #tpu.memory_space<vmem>>, %arg3: memref<1x128xf32, #tpu.memory_space<vmem>>) attributes {dimension_semantics = [#tpu.dimension_semantics<parallel>], iteration_bounds = array<i64: 1>, scalar_prefetch = 0 : i64, scratch_operands = 0 : i64, tpu.core_type = #tpu.core_type<tc>, window_params = [{transform_indices = @transform_0, window_bounds = array<i64: 128, 128>}, {pipeline_mode = #tpu.pipeline_mode<synchronous>, transform_indices = @transform_1, window_bounds = array<i64: 288, 128>}, {transform_indices = @transform_2, window_bounds = array<i64: 1, 128>}]} {
    %c0 = arith.constant 0 : index
    %c0_0 = arith.constant 0 : index
    %0 = vector.load %arg1[%c0, %c0_0] : memref<128x128xf32, #tpu.memory_space<vmem>>, vector<128x128xf32>
    %c0_1 = arith.constant 0 : index
    %c0_2 = arith.constant 0 : index
    %1 = vector.load %arg2[%c0_1, %c0_2] : memref<288x128xf32, #tpu.memory_space<vmem>>, vector<128x128xf32>
    %c128 = arith.constant 128 : index
    %c0_3 = arith.constant 0 : index
    %2 = vector.load %arg2[%c128, %c0_3] : memref<288x128xf32, #tpu.memory_space<vmem>>, vector<1x128xf32>
    %c136 = arith.constant 136 : index
    %c0_4 = arith.constant 0 : index
    %3 = vector.load %arg2[%c136, %c0_4] : memref<288x128xf32, #tpu.memory_space<vmem>>, vector<128x128xf32>
    %c264 = arith.constant 264 : index
    %c0_5 = arith.constant 0 : index
    %4 = vector.load %arg2[%c264, %c0_5] : memref<288x128xf32, #tpu.memory_space<vmem>>, vector<1x128xf32>
    %c272 = arith.constant 272 : index
    %c0_6 = arith.constant 0 : index
    %5 = vector.load %arg2[%c272, %c0_6] : memref<288x128xf32, #tpu.memory_space<vmem>>, vector<1x128xf32>
    %c280 = arith.constant 280 : index
    %c0_7 = arith.constant 0 : index
    %6 = vector.load %arg2[%c280, %c0_7] : memref<288x128xf32, #tpu.memory_space<vmem>>, vector<1x1xf32>
    %cst = arith.constant dense<0.000000e+00> : vector<128x128xf32>
    %7 = tpu.matmul %0, %1, %cst {dimension_numbers = #tpu.dot_dimension_numbers<[1], [0], [0], [1], [0, 0, 1, 1], [], []>} : vector<128x128xf32>, vector<128x128xf32>, vector<128x128xf32> -> vector<128x128xf32>
    %8 = vector.broadcast %2 : vector<1x128xf32> to vector<128x128xf32>
    %9 = arith.addf %7, %8 : vector<128x128xf32>
    %cst_8 = arith.constant 0.000000e+00 : f32
    %10 = vector.broadcast %cst_8 : f32 to vector<128x128xf32>
    %11 = arith.maximumf %9, %10 : vector<128x128xf32>
    %cst_9 = arith.constant dense<0.000000e+00> : vector<128x128xf32>
    %12 = tpu.matmul %11, %3, %cst_9 {dimension_numbers = #tpu.dot_dimension_numbers<[1], [0], [0], [1], [0, 0, 1, 1], [], []>} : vector<128x128xf32>, vector<128x128xf32>, vector<128x128xf32> -> vector<128x128xf32>
    %13 = vector.broadcast %4 : vector<1x128xf32> to vector<128x128xf32>
    %14 = arith.addf %12, %13 : vector<128x128xf32>
    %cst_10 = arith.constant 0.000000e+00 : f32
    %15 = vector.broadcast %cst_10 : f32 to vector<128x128xf32>
    %16 = arith.maximumf %14, %15 : vector<128x128xf32>
    %cst_11 = arith.constant dense<0.000000e+00> : vector<1x128xf32>
    %17 = tpu.matmul %5, %16, %cst_11 {dimension_numbers = #tpu.dot_dimension_numbers<[1], [1], [0], [0], [0, 0, 1, 0], [], []>} : vector<1x128xf32>, vector<128x128xf32>, vector<1x128xf32> -> vector<1x128xf32>
    %18 = vector.broadcast %6 : vector<1x1xf32> to vector<1x128xf32>
    %19 = arith.addf %17, %18 : vector<1x128xf32>
    %c0_12 = arith.constant 0 : index
    %c0_13 = arith.constant 0 : index
    %20 = vector.load %arg3[%c0_12, %c0_13] : memref<1x128xf32, #tpu.memory_space<vmem>>, vector<1x128xf32>
    tpu.vector_store %arg3[%c0_12, %c0_13], %19 {strides = array<i32>} : memref<1x128xf32, #tpu.memory_space<vmem>>, vector<1x128xf32>,
    return
  }
  func.func @transform_0(%arg0: i32) -> (i32, i32) {
    %c0_i32 = arith.constant 0 : i32
    %c0_i32_0 = arith.constant 0 : i32
    return %arg0, %c0_i32 : i32, i32
  }
  func.func @transform_1(%arg0: i32) -> (i32, i32) {
    %c0_i32 = arith.constant 0 : i32
    %c0_i32_0 = arith.constant 0 : i32
    %c0_i32_1 = arith.constant 0 : i32
    return %c0_i32, %c0_i32_0 : i32, i32
  }
  func.func @transform_2(%arg0: i32) -> (i32, i32) {
    %c0_i32 = arith.constant 0 : i32
    %c0_i32_0 = arith.constant 0 : i32
    return %c0_i32, %arg0 : i32, i32
  }
}

</mosaic_0001>

<llo_original>
// kernel: tpu_custom_call.1
$region0: #{tpu_custom_call.1}
  #allocation0 [shape = 'u32[]', space=smem, size = 0x4, offset = 0x4, fixed_abs, tag = 'smem constant byte address 0x4 - core index']
  #allocation1 [shape = 'u32[72,128]{1,0:T(1,128)}', space=vmem, size = 0x9000, scoped, tag = 'internal scratch']
  %s0 = inlined_call_operand.hbm [shape: f32[128,128], index: 0, kind: input, shape index: {}]
  %s1 = inlined_call_operand.hbm [shape: f32[288,128], index: 1, kind: input, shape index: {}]
  %s2 = inlined_call_operand.hbm [shape: f32[1,128], index: 2, kind: output, shape index: {}]
  %s3 = sld [smem:[#allocation0]]
  $region26: #{tpu_custom_call.1} parent=0
    _
  %s5 = ssub.s32 1, %s3
  %s6 = scalar_select 0, %s5, %s3
  $region1: #{tpu_custom_call.1} parent=0
    #allocation2 [shape = 'u8[65536]{0}', space=vmem, size = 0x10000, scoped, tag = 'input window, operand 0, single buffered']
    #allocation3 [shape = 's32[1]{0}', space=sflag, size = 0x4, scoped, tag = 'scoped memory for tpu_custom_call.1']
    #allocation4 [shape = 's32[1]{0}', space=sflag, size = 0x4, scoped, tag = 'scoped memory for tpu_custom_call.1']
    #allocation5 [shape = 'u8[147456]{0}', space=vmem, size = 0x24000, scoped, tag = 'input window, operand 1, single buffered']
    #allocation6 [shape = 's32[1]{0}', space=sflag, size = 0x4, scoped, tag = 'scoped memory for tpu_custom_call.1']
    #allocation7 [shape = 'u8[512]{0}', space=vmem, size = 0x400, scoped, tag = 'output window, operand 0, single buffered']
    %7 = vsyncpa [#allocation3], 0
    %8 = vsyncpa [#allocation6], 0
    %9 = vsyncpa [#allocation4], 0
    // Predicated region
    $region2: #{tpu_custom_call.1} parent=1 // pred_check
      _
    $region3: #{tpu_custom_call.1} parent=1 // pred_check_branch
      %11 = sbr.rel (0) target = $region5
    $region4: #{tpu_custom_call.1} parent=1 // pred_region
      %13 = vsyncadd [#allocation3], 0
      %s14 = sshll.u32 %s0, 4
      %s15 = int_to_ptr.hbm [resolvable:$true] %s14
      %s16 = sshll.u32 [#allocation2], 4
      %s17 = int_to_ptr.vmem [resolvable:$true] %s16
      %22 = dma.hbm_to_vmem [thread:$0]  %s15, 2048, %s17, [#allocation3], 128, 128, 8
    $region5: #{tpu_custom_call.1} parent=1 // pred_fallthru
      _
    // Predicated region
    $region6: #{tpu_custom_call.1} parent=1 // pred_check
      _
    $region7: #{tpu_custom_call.1} parent=1 // pred_check_branch
      %24 = sbr.rel (0) target = $region9
    $region8: #{tpu_custom_call.1} parent=1 // pred_region
      %26 = vsyncadd [#allocation6], 0
      %s27 = sshll.u32 %s1, 4
      %s28 = int_to_ptr.hbm [resolvable:$true] %s27
      %s29 = sshll.u32 [#allocation5], 4
      %s30 = int_to_ptr.vmem [resolvable:$true] %s29
      %35 = dma.hbm_to_vmem [thread:$0]  %s28, 4608, %s30, [#allocation6], 128, 128, 8
    $region9: #{tpu_custom_call.1} parent=1 // pred_fallthru
      _
    // Predicated region
    $region10: #{tpu_custom_call.1} parent=1 // pred_check
      _
    $region11: #{tpu_custom_call.1} parent=1 // pred_check_branch
      %37 = sbr.rel (0) target = $region13
    $region12: #{tpu_custom_call.1} parent=1 // pred_region
      %39 = dma.done [#allocation3], 2048
    $region13: #{tpu_custom_call.1} parent=1 // pred_fallthru
      _
    // Predicated region
    $region14: #{tpu_custom_call.1} parent=1 // pred_check
      _
    $region15: #{tpu_custom_call.1} parent=1 // pred_check_branch
      %41 = sbr.rel (0) target = $region17
    $region16: #{tpu_custom_call.1} parent=1 // pred_region
      %43 = dma.done [#allocation6], 4608
    $region17: #{tpu_custom_call.1} parent=1 // pred_fallthru
      _
    %v44 = vld [vmem:[#allocation2] sm:$0xff]
    %v45 = vld [vmem:[#allocation2 + $0x8] sm:$0xff]
    %v46 = vld [vmem:[#allocation2 + $0x10] sm:$0xff]
    %v47 = vld [vmem:[#allocation2 + $0x18] sm:$0xff]
    %v48 = vld [vmem:[#allocation2 + $0x20] sm:$0xff]
    %v49 = vld [vmem:[#allocation2 + $0x28] sm:$0xff]
    %v50 = vld [vmem:[#allocation2 + $0x30] sm:$0xff]
    %v51 = vld [vmem:[#allocation2 + $0x38] sm:$0xff]
    %v52 = vld [vmem:[#allocation2 + $0x40] sm:$0xff]
    %v53 = vld [vmem:[#allocation2 + $0x48] sm:$0xff]
    %v54 = vld [vmem:[#allocation2 + $0x50] sm:$0xff]
    %v55 = vld [vmem:[#allocation2 + $0x58] sm:$0xff]
    %v56 = vld [vmem:[#allocation2 + $0x60] sm:$0xff]
    %v57 = vld [vmem:[#allocation2 + $0x68] sm:$0xff]
    %v58 = vld [vmem:[#allocation2 + $0x70] sm:$0xff]
    %v59 = vld [vmem:[#allocation2 + $0x78] sm:$0xff]
    %v60 = vld [vmem:[#allocation5] sm:$0xff]
    %v61 = vld [vmem:[#allocation5 + $0x8] sm:$0xff]
    %v62 = vld [vmem:[#allocation5 + $0x10] sm:$0xff]
    %v63 = vld [vmem:[#allocation5 + $0x18] sm:$0xff]
    %v64 = vld [vmem:[#allocation5 + $0x20] sm:$0xff]
    %v65 = vld [vmem:[#allocation5 + $0x28] sm:$0xff]
    %v66 = vld [vmem:[#allocation5 + $0x30] sm:$0xff]
    %v67 = vld [vmem:[#allocation5 + $0x38] sm:$0xff]
    %v68 = vld [vmem:[#allocation5 + $0x40] sm:$0xff]
    %v69 = vld [vmem:[#allocation5 + $0x48] sm:$0xff]
    %v70 = vld [vmem:[#allocation5 + $0x50] sm:$0xff]
    %v71 = vld [vmem:[#allocation5 + $0x58] sm:$0xff]
    %v72 = vld [vmem:[#allocation5 + $0x60] sm:$0xff]
    %v73 = vld [vmem:[#allocation5 + $0x68] sm:$0xff]
    %v74 = vld [vmem:[#allocation5 + $0x70] sm:$0xff]
    %v75 = vld [vmem:[#allocation5 + $0x78] sm:$0xff]
    %v76 = vld [vmem:[#allocation5 + $0x80] sm:$0x1]
    %v77 = vld [vmem:[#allocation5 + $0x88] sm:$0xff]
    %v78 = vld [vmem:[#allocation5 + $0x90] sm:$0xff]
    %v79 = vld [vmem:[#allocation5 + $0x98] sm:$0xff]
    %v80 = vld [vmem:[#allocation5 + $0xa0] sm:$0xff]
    %v81 = vld [vmem:[#allocation5 + $0xa8] sm:$0xff]
    %v82 = vld [vmem:[#allocation5 + $0xb0] sm:$0xff]
    %v83 = vld [vmem:[#allocation5 + $0xb8] sm:$0xff]
    %v84 = vld [vmem:[#allocation5 + $0xc0] sm:$0xff]
    %v85 = vld [vmem:[#allocation5 + $0xc8] sm:$0xff]
    %v86 = vld [vmem:[#allocation5 + $0xd0] sm:$0xff]
    %v87 = vld [vmem:[#allocation5 + $0xd8] sm:$0xff]
    %v88 = vld [vmem:[#allocation5 + $0xe0] sm:$0xff]
    %v89 = vld [vmem:[#allocation5 + $0xe8] sm:$0xff]
    %v90 = vld [vmem:[#allocation5 + $0xf0] sm:$0xff]
    %v91 = vld [vmem:[#allocation5 + $0xf8] sm:$0xff]
    %v92 = vld [vmem:[#allocation5 + $0x100] sm:$0xff]
    %v93 = vld [vmem:[#allocation5 + $0x108] sm:$0x1]
    %v94 = vld [vmem:[#allocation5 + $0x110] sm:$0x1]
    %v95 = vld [vmem:[#allocation5 + $0x118] sm:$0x1]
    %v96 = vperm.slane %v76, 0
    %97 = vmatpush.msra.mxu0 %v75
    %98 = vmatpush.msra.mxu0 %v74
    %99 = vmatpush.msra.mxu0 %v73
    %100 = vmatpush.msra.mxu0 %v72
    %101 = vmatpush.msra.mxu0 %v71
    %102 = vmatpush.msra.mxu0 %v70
    %103 = vmatpush.msra.mxu0 %v69
    %104 = vmatpush.msra.mxu0 %v68
    %105 = vmatpush.msra.mxu0 %v67
    %106 = vmatpush.msra.mxu0 %v66
    %107 = vmatpush.msra.mxu0 %v65
    %108 = vmatpush.msra.mxu0 %v64
    %109 = vmatpush.msra.mxu0 %v63
    %110 = vmatpush.msra.mxu0 %v62
    %111 = vmatpush.msra.mxu0 %v61
    %112 = vmatpush.msra.mxu0 %v60
    %113 = vmatmul.f32.gmra.mxu0 %v44
    %v114 = vpop.f32.mrf.mxu0
    %v115 = vadd.f32 %v96, %v114
    %116 = vmatmul.f32.gmra.mxu0 %v45
    %v117 = vpop.f32.mrf.mxu0
    %v118 = vadd.f32 %v96, %v117
    %119 = vmatmul.f32.gmra.mxu0 %v46
    %v120 = vpop.f32.mrf.mxu0
    %v121 = vadd.f32 %v96, %v120
    %122 = vmatmul.f32.gmra.mxu0 %v47
    %v123 = vpop.f32.mrf.mxu0
    %v124 = vadd.f32 %v96, %v123
    %125 = vmatmul.f32.gmra.mxu0 %v48
    %v126 = vpop.f32.mrf.mxu0
    %v127 = vadd.f32 %v96, %v126
    %128 = vmatmul.f32.gmra.mxu0 %v49
    %v129 = vpop.f32.mrf.mxu0
    %v130 = vadd.f32 %v96, %v129
    %131 = vmatmul.f32.gmra.mxu0 %v50
    %v132 = vpop.f32.mrf.mxu0
    %v133 = vadd.f32 %v96, %v132
    %134 = vmatmul.f32.gmra.mxu0 %v51
    %v135 = vpop.f32.mrf.mxu0
    %v136 = vadd.f32 %v96, %v135
    %137 = vmatmul.f32.gmra.mxu0 %v52
    %v138 = vpop.f32.mrf.mxu0
    %v139 = vadd.f32 %v96, %v138
    %140 = vmatmul.f32.gmra.mxu0 %v53
    %v141 = vpop.f32.mrf.mxu0
    %v142 = vadd.f32 %v96, %v141
    %143 = vmatmul.f32.gmra.mxu0 %v54
    %v144 = vpop.f32.mrf.mxu0
    %v145 = vadd.f32 %v96, %v144
    %146 = vmatmul.f32.gmra.mxu0 %v55
    %v147 = vpop.f32.mrf.mxu0
    %v148 = vadd.f32 %v96, %v147
    %149 = vmatmul.f32.gmra.mxu0 %v56
    %v150 = vpop.f32.mrf.mxu0
    %v151 = vadd.f32 %v96, %v150
    %152 = vmatmul.f32.gmra.mxu0 %v57
    %v153 = vpop.f32.mrf.mxu0
    %v154 = vadd.f32 %v96, %v153
    %155 = vmatmul.f32.gmra.mxu0 %v58
    %v156 = vpop.f32.mrf.mxu0
    %v157 = vadd.f32 %v96, %v156
    %158 = vmatmul.f32.gmra.mxu0 %v59
    %v159 = vpop.f32.mrf.mxu0
    %v160 = vadd.f32 %v96, %v159
    %161 = vdwg.mxu0
    %v162 = vmax.f32 %v115, 0.0
    %v163 = vmax.f32 %v118, 0.0
    %v164 = vmax.f32 %v121, 0.0
    %v165 = vmax.f32 %v124, 0.0
    %v166 = vmax.f32 %v127, 0.0
    %v167 = vmax.f32 %v130, 0.0
    %v168 = vmax.f32 %v133, 0.0
    %v169 = vmax.f32 %v136, 0.0
    %v170 = vmax.f32 %v139, 0.0
    %v171 = vmax.f32 %v142, 0.0
    %v172 = vmax.f32 %v145, 0.0
    %v173 = vmax.f32 %v148, 0.0
    %v174 = vmax.f32 %v151, 0.0
    %v175 = vmax.f32 %v154, 0.0
    %v176 = vmax.f32 %v157, 0.0
    %v177 = vmax.f32 %v160, 0.0
    %v178 = vperm.slane %v93, 0
    %179 = vmatpush.msra.mxu0 %v92
    %180 = vmatpush.msra.mxu0 %v91
    %181 = vmatpush.msra.mxu0 %v90
    %182 = vmatpush.msra.mxu0 %v89
    %183 = vmatpush.msra.mxu0 %v88
    %184 = vmatpush.msra.mxu0 %v87
    %185 = vmatpush.msra.mxu0 %v86
    %186 = vmatpush.msra.mxu0 %v85
    %187 = vmatpush.msra.mxu0 %v84
    %188 = vmatpush.msra.mxu0 %v83
    %189 = vmatpush.msra.mxu0 %v82
    %190 = vmatpush.msra.mxu0 %v81
    %191 = vmatpush.msra.mxu0 %v80
    %192 = vmatpush.msra.mxu0 %v79
    %193 = vmatpush.msra.mxu0 %v78
    %194 = vmatpush.msra.mxu0 %v77
    %195 = vmatmul.f32.gmra.mxu0 %v162
    %v196 = vpop.f32.mrf.mxu0
    %v197 = vadd.f32 %v178, %v196
    %198 = vmatmul.f32.gmra.mxu0 %v163
    %v199 = vpop.f32.mrf.mxu0
    %v200 = vadd.f32 %v178, %v199
    %201 = vmatmul.f32.gmra.mxu0 %v164
    %v202 = vpop.f32.mrf.mxu0
    %v203 = vadd.f32 %v178, %v202
    %204 = vmatmul.f32.gmra.mxu0 %v165
    %v205 = vpop.f32.mrf.mxu0
    %v206 = vadd.f32 %v178, %v205
    %207 = vmatmul.f32.gmra.mxu0 %v166
    %v208 = vpop.f32.mrf.mxu0
    %v209 = vadd.f32 %v178, %v208
    %210 = vmatmul.f32.gmra.mxu0 %v167
    %v211 = vpop.f32.mrf.mxu0
    %v212 = vadd.f32 %v178, %v211
    %213 = vmatmul.f32.gmra.mxu0 %v168
    %v214 = vpop.f32.mrf.mxu0
    %v215 = vadd.f32 %v178, %v214
    %216 = vmatmul.f32.gmra.mxu0 %v169
    %v217 = vpop.f32.mrf.mxu0
    %v218 = vadd.f32 %v178, %v217
    %219 = vmatmul.f32.gmra.mxu0 %v170
    %v220 = vpop.f32.mrf.mxu0
    %v221 = vadd.f32 %v178, %v220
    %222 = vmatmul.f32.gmra.mxu0 %v171
    %v223 = vpop.f32.mrf.mxu0
    %v224 = vadd.f32 %v178, %v223
    %225 = vmatmul.f32.gmra.mxu0 %v172
    %v226 = vpop.f32.mrf.mxu0
    %v227 = vadd.f32 %v178, %v226
    %228 = vmatmul.f32.gmra.mxu0 %v173
    %v229 = vpop.f32.mrf.mxu0
    %v230 = vadd.f32 %v178, %v229
    %231 = vmatmul.f32.gmra.mxu0 %v174
    %v232 = vpop.f32.mrf.mxu0
    %v233 = vadd.f32 %v178, %v232
    %234 = vmatmul.f32.gmra.mxu0 %v175
    %v235 = vpop.f32.mrf.mxu0
    %v236 = vadd.f32 %v178, %v235
    %237 = vmatmul.f32.gmra.mxu0 %v176
    %v238 = vpop.f32.mrf.mxu0
    %v239 = vadd.f32 %v178, %v238
    %240 = vmatmul.f32.gmra.mxu0 %v177
    %v241 = vpop.f32.mrf.mxu0
    %v242 = vadd.f32 %v178, %v241
    %243 = vdwg.mxu0
    %v244 = vmax.f32 %v197, 0.0
    %v245 = vmax.f32 %v200, 0.0
    %v246 = vmax.f32 %v203, 0.0
    %v247 = vmax.f32 %v206, 0.0
    %v248 = vmax.f32 %v209, 0.0
    %v249 = vmax.f32 %v212, 0.0
    %v250 = vmax.f32 %v215, 0.0
    %v251 = vmax.f32 %v218, 0.0
    %v252 = vmax.f32 %v221, 0.0
    %v253 = vmax.f32 %v224, 0.0
    %v254 = vmax.f32 %v227, 0.0
    %v255 = vmax.f32 %v230, 0.0
    %v256 = vmax.f32 %v233, 0.0
    %v257 = vmax.f32 %v236, 0.0
    %v258 = vmax.f32 %v239, 0.0
    %v259 = vmax.f32 %v242, 0.0
    %261 = vset.pattern.permute.xlu0 0
    %262 = vperm.xlu0 %261, %v95
    %v263 = vpop.permute.xlu0 %262
    %265 = vmatpush.xpose.msra.mxu0 %v259
    %266 = vmatpush.xpose.msra.mxu0 %v258
    %267 = vmatpush.xpose.msra.mxu0 %v257
    %268 = vmatpush.xpose.msra.mxu0 %v256
    %269 = vmatpush.xpose.msra.mxu0 %v255
    %270 = vmatpush.xpose.msra.mxu0 %v254
    %271 = vmatpush.xpose.msra.mxu0 %v253
    %272 = vmatpush.xpose.msra.mxu0 %v252
    %273 = vmatpush.xpose.msra.mxu0 %v251
    %274 = vmatpush.xpose.msra.mxu0 %v250
    %275 = vmatpush.xpose.msra.mxu0 %v249
    %276 = vmatpush.xpose.msra.mxu0 %v248
    %277 = vmatpush.xpose.msra.mxu0 %v247
    %278 = vmatpush.xpose.msra.mxu0 %v246
    %279 = vmatpush.xpose.msra.mxu0 %v245
    %280 = vmatpush.xpose.msra.mxu0 %v244
    %281 = vmatmul.f32.gmra.mxu0 %v94
    %v282 = vpop.f32.mrf.mxu0
    %v283 = vadd.f32 %v263, %v282
    %284 = vdwg.mxu0
    %285 = vst [vmem:[#allocation7] sm:$0x1] %v283
    // Predicated region
    $region18: #{tpu_custom_call.1} parent=1 // pred_check
      _
    $region19: #{tpu_custom_call.1} parent=1 // pred_check_branch
      %287 = sbr.rel (0) target = $region21
    $region20: #{tpu_custom_call.1} parent=1 // pred_region
      %289 = vsyncadd [#allocation4], 0
      %s291 = sshll.u32 [#allocation7], 4
      %s292 = int_to_ptr.vmem [resolvable:$true] %s291
      %s293 = sshll.u32 %s2, 4
      %s294 = int_to_ptr.hbm [resolvable:$true] %s293
      %296 = dma.vmem_to_hbm [thread:$0]  %s292, 16, %s294, [#allocation4]
    $region21: #{tpu_custom_call.1} parent=1 // pred_fallthru
      _
    // Predicated region
    $region22: #{tpu_custom_call.1} parent=1 // pred_check
      _
    $region23: #{tpu_custom_call.1} parent=1 // pred_check_branch
      %298 = sbr.rel (0) target = $region25
    $region24: #{tpu_custom_call.1} parent=1 // pred_region
      %300 = dma.done [#allocation4], 16
    $region25: #{tpu_custom_call.1} parent=1 // pred_fallthru
      _
    %301 = vsyncpa [#allocation3], 1
    %302 = vsyncpa [#allocation6], 1
    %303 = vsyncpa [#allocation4], 1

</llo_original>
